<compile_context>
chip_gen: v7x
topology: tpu7x:2x2x1
jax: 0.10.0
libtpu: 0.0.40
codegen_flags: <defaults>
</compile_context>

<pallas_src>
import functools

import jax
import jax.numpy as jnp
from jax import lax
from jax.experimental import pallas as pl
from jax.experimental.pallas import tpu as pltpu


NEG_SLOPE = 0.01   # PyTorch nn.LeakyReLU default negative_slope
CAP_SG = 512       # max sublane rows per grid step (512*128 rows, ~2 MiB f32 / block)


def _cdiv(a, b):
    return -(-a // b)


def _round_up(v, m):
    return _cdiv(v, m) * m


def _mlp_kernel(w_ref, x_ref, o_ref, *, dims, sub):
    """Fused VPU-only MLP on one lane-dense batch tile.

    w_ref : SMEM (n_params,) f32  -- scalar-prefetched packed [W1, b1, ..., W5, b5].
    x_ref : VMEM (in_features, SG, 128)  -- batch tile on (sublane, lane).
    o_ref : VMEM (out_features, SG, 128) f32.
    """
    n_layers = len(dims) - 1
    n_params = sum(dims[l] * dims[l + 1] + dims[l + 1] for l in range(n_layers))

    # Hoist every weight/bias scalar read (cheap SMEM sld) above the sub-block loop.
    w = [w_ref[k] for k in range(n_params)]

    sg = x_ref.shape[1]
    n_sub = sg // sub

    def process(off):
        # One (sub, 128) vreg-sized slab per input feature; widen to f32 for compute.
        h = [x_ref[i, pl.ds(off, sub), :].astype(jnp.float32) for i in range(dims[0])]
        p = 0
        for l in range(n_layers):
            d_in, d_out = dims[l], dims[l + 1]
            w_off = p                      # row-major (in, out) weight scalars
            b_off = p + d_in * d_out
            p = b_off + d_out
            nxt = []
            for j in range(d_out):
                acc = h[0] * w[w_off + j]
                for i in range(1, d_in):
                    acc = acc + h[i] * w[w_off + i * d_out + j]
                acc = acc + w[b_off + j]
                if l < n_layers - 1:
                    # LeakyReLU: max(x, slope*x) == where(x>=0, x, slope*x) for 0<slope<1.
                    acc = jnp.maximum(acc, NEG_SLOPE * acc)
                else:
                    acc = jax.nn.sigmoid(acc)          # EUP
                nxt.append(acc)
            h = nxt
        for j in range(dims[-1]):
            o_ref[j, pl.ds(off, sub), :] = h[j]

    if n_sub == 1:
        process(0)
    else:
        def body(g, carry):
            process(pl.multiple_of(g * sub, sub))
            return carry
        lax.fori_loop(0, n_sub, body, 0, unroll=2)


def data_model_forward(x, params, *, stream_dtype=jnp.float32):
    """Forward pass of DataModel.

    x            : (batch, in_features) array.
    params       : [(W1, b1), ..., (W5, b5)] with W_i shaped (in_i, out_i), b_i (out_i,)
                   (i.e. x @ W + b; PyTorch stores W as (out, in) -> pass W.T here).
    stream_dtype : dtype for streaming activations through HBM (bf16 on v6e/v7x halves
                   input bytes; keep f32 on v5e).  Compute is always f32.
    """
    B, in_features = x.shape
    dims = [in_features] + [int(w.shape[-1]) for w, _ in params]
    out_features = dims[-1]

    # Pack every weight & bias into ONE flat f32 buffer (scalar-prefetched to SMEM).
    pieces = []
    for l, (w, b) in enumerate(params):
        assert w.shape == (dims[l], dims[l + 1]), (w.shape, (dims[l], dims[l + 1]))
        assert b.shape == (dims[l + 1],), (b.shape, dims[l + 1])
        pieces.append(jnp.asarray(w, jnp.float32).reshape(-1))
        pieces.append(jnp.asarray(b, jnp.float32).reshape(-1))
    packed = jnp.concatenate(pieces)

    # Lane-dense batch layout: batch -> (sublane-group, 128-lane) axes.
    G = _cdiv(B, 128)                       # number of 128-lane groups
    if G <= 8:
        SG = G                              # single tile (full-dim on sublane axis)
        G_pad = G
    else:
        SG = min(_round_up(G, 8), CAP_SG)   # big tiles amortize per-step overhead
        if _round_up(G, SG) // SG < 2:      # keep >= 2 grid steps (v7x has 2 TCs)
            SG = max(8, _round_up(_cdiv(G, 2), 8))
        G_pad = _round_up(G, SG)
    B_pad = G_pad * 128

    # Single fused pad+transpose copy into the lane-dense layout.
    x_t = jnp.asarray(x, jnp.float32).T                     # (in_features, B)
    if B_pad != B:
        x_t = jnp.pad(x_t, ((0, 0), (0, B_pad - B)))
    x_r = x_t.reshape(in_features, G_pad, 128).astype(stream_dtype)

    grid = (G_pad // SG,)
    sub = min(SG, 8)

    macs = sum(dims[i] * dims[i + 1] for i in range(len(dims) - 1))
    cost = pl.CostEstimate(
        flops=2 * B_pad * macs,
        transcendentals=B_pad * out_features,
        bytes_accessed=(B_pad * in_features * x_r.dtype.itemsize
                        + 4 * B_pad * out_features
                        + 4 * int(packed.size)),
    )

    kernel = functools.partial(_mlp_kernel, dims=tuple(dims), sub=sub)
    out_r = pl.pallas_call(
        kernel,
        out_shape=jax.ShapeDtypeStruct((out_features, G_pad, 128), jnp.float32),
        grid_spec=pltpu.PrefetchScalarGridSpec(
            num_scalar_prefetch=1,                           # packed params -> SMEM
            grid=grid,
            in_specs=[
                pl.BlockSpec((in_features, SG, 128), lambda i, w: (0, i, 0)),
            ],
            out_specs=pl.BlockSpec((out_features, SG, 128), lambda i, w: (0, i, 0)),
        ),
        compiler_params=pltpu.CompilerParams(
            dimension_semantics=("parallel",),
        ),
        cost_estimate=cost,
    )(packed, x_r)

    # Back to (batch, out_features); drop batch padding.
    out = out_r.reshape(out_features, B_pad).T
    return out[:B]


def make_params(key, in_features, out_features):
    """Deterministic synthetic parameters for the 5-layer MLP."""
    dims = [in_features, 6, 5, 4, 3, out_features]
    params = []
    for i in range(5):
        key, kw, kb = jax.random.split(key, 3)
        scale = 1.0 / jnp.sqrt(jnp.float32(dims[i]))
        w = jax.random.uniform(kw, (dims[i], dims[i + 1]), jnp.float32, -scale, scale)
        b = jax.random.uniform(kb, (dims[i + 1],), jnp.float32, -scale, scale)
        params.append((w, b))
    return params


def reference_forward(x, params):
    h = jnp.asarray(x, jnp.float32)
    for i, (w, b) in enumerate(params):
        h = h @ w + b
        if i < len(params) - 1:
            h = jnp.where(h >= 0, h, NEG_SLOPE * h)
        else:
            h = jax.nn.sigmoid(h)
    return h


if __name__ == "__main__":
    key = jax.random.PRNGKey(0)
    in_features, out_features = 8, 2

    key, kp = jax.random.split(key)
    params = make_params(kp, in_features, out_features)

    # Small case: single tile, batch not lane-aligned -> exercises pad + slice.
    key, kx = jax.random.split(key)
    x_small = jax.random.normal(kx, (16, in_features), dtype=jnp.float32)
    y_small = jax.block_until_ready(data_model_forward(x_small, params))
    assert y_small.shape == (16, out_features)
    assert jnp.allclose(y_small, reference_forward(x_small, params), atol=1e-5, rtol=1e-5)

    # Larger case: multi-step batch grid (parallel axis) + inner sub-block loop.
    key, kx2 = jax.random.split(key)
    x_big = jax.random.normal(kx2, (2560, in_features), dtype=jnp.float32)
    y_big = jax.block_until_ready(data_model_forward(x_big, params))
    assert y_big.shape == (2560, out_features)
    assert jnp.allclose(y_big, reference_forward(x_big, params), atol=1e-5, rtol=1e-5)

    print("KERNEL_OK")
</pallas_src>

<mosaic_0001>
module attributes {stable_mosaic.version = 11 : i64} {
  func.func @_mlp_kernel(%arg0: i32, %arg1: memref<136xf32, #tpu.memory_space<smem>>, %arg2: memref<8x1x128xf32, #tpu.memory_space<vmem>>, %arg3: memref<2x1x128xf32, #tpu.memory_space<vmem>>) attributes {dimension_semantics = [#tpu.dimension_semantics<parallel>], iteration_bounds = array<i64: 1>, scalar_prefetch = 1 : i64, scratch_operands = 0 : i64, tpu.core_type = #tpu.core_type<tc>, window_params = [{transform_indices = @transform_0, window_bounds = array<i64: 8, 1, 128>}, {transform_indices = @transform_1, window_bounds = array<i64: 2, 1, 128>}]} {
    %c0 = arith.constant 0 : index
    %0 = memref.load %arg1[%c0] : memref<136xf32, #tpu.memory_space<smem>>
    %c1 = arith.constant 1 : index
    %1 = memref.load %arg1[%c1] : memref<136xf32, #tpu.memory_space<smem>>
    %c2 = arith.constant 2 : index
    %2 = memref.load %arg1[%c2] : memref<136xf32, #tpu.memory_space<smem>>
    %c3 = arith.constant 3 : index
    %3 = memref.load %arg1[%c3] : memref<136xf32, #tpu.memory_space<smem>>
    %c4 = arith.constant 4 : index
    %4 = memref.load %arg1[%c4] : memref<136xf32, #tpu.memory_space<smem>>
    %c5 = arith.constant 5 : index
    %5 = memref.load %arg1[%c5] : memref<136xf32, #tpu.memory_space<smem>>
    %c6 = arith.constant 6 : index
    %6 = memref.load %arg1[%c6] : memref<136xf32, #tpu.memory_space<smem>>
    %c7 = arith.constant 7 : index
    %7 = memref.load %arg1[%c7] : memref<136xf32, #tpu.memory_space<smem>>
    %c8 = arith.constant 8 : index
    %8 = memref.load %arg1[%c8] : memref<136xf32, #tpu.memory_space<smem>>
    %c9 = arith.constant 9 : index
    %9 = memref.load %arg1[%c9] : memref<136xf32, #tpu.memory_space<smem>>
    %c10 = arith.constant 10 : index
    %10 = memref.load %arg1[%c10] : memref<136xf32, #tpu.memory_space<smem>>
    %c11 = arith.constant 11 : index
    %11 = memref.load %arg1[%c11] : memref<136xf32, #tpu.memory_space<smem>>
    %c12 = arith.constant 12 : index
    %12 = memref.load %arg1[%c12] : memref<136xf32, #tpu.memory_space<smem>>
    %c13 = arith.constant 13 : index
    %13 = memref.load %arg1[%c13] : memref<136xf32, #tpu.memory_space<smem>>
    %c14 = arith.constant 14 : index
    %14 = memref.load %arg1[%c14] : memref<136xf32, #tpu.memory_space<smem>>
    %c15 = arith.constant 15 : index
    %15 = memref.load %arg1[%c15] : memref<136xf32, #tpu.memory_space<smem>>
    %c16 = arith.constant 16 : index
    %16 = memref.load %arg1[%c16] : memref<136xf32, #tpu.memory_space<smem>>
    %c17 = arith.constant 17 : index
    %17 = memref.load %arg1[%c17] : memref<136xf32, #tpu.memory_space<smem>>
    %c18 = arith.constant 18 : index
    %18 = memref.load %arg1[%c18] : memref<136xf32, #tpu.memory_space<smem>>
    %c19 = arith.constant 19 : index
    %19 = memref.load %arg1[%c19] : memref<136xf32, #tpu.memory_space<smem>>
    %c20 = arith.constant 20 : index
    %20 = memref.load %arg1[%c20] : memref<136xf32, #tpu.memory_space<smem>>
    %c21 = arith.constant 21 : index
    %21 = memref.load %arg1[%c21] : memref<136xf32, #tpu.memory_space<smem>>
    %c22 = arith.constant 22 : index
    %22 = memref.load %arg1[%c22] : memref<136xf32, #tpu.memory_space<smem>>
    %c23 = arith.constant 23 : index
    %23 = memref.load %arg1[%c23] : memref<136xf32, #tpu.memory_space<smem>>
    %c24 = arith.constant 24 : index
    %24 = memref.load %arg1[%c24] : memref<136xf32, #tpu.memory_space<smem>>
    %c25 = arith.constant 25 : index
    %25 = memref.load %arg1[%c25] : memref<136xf32, #tpu.memory_space<smem>>
    %c26 = arith.constant 26 : index
    %26 = memref.load %arg1[%c26] : memref<136xf32, #tpu.memory_space<smem>>
    %c27 = arith.constant 27 : index
    %27 = memref.load %arg1[%c27] : memref<136xf32, #tpu.memory_space<smem>>
    %c28 = arith.constant 28 : index
    %28 = memref.load %arg1[%c28] : memref<136xf32, #tpu.memory_space<smem>>
    %c29 = arith.constant 29 : index
    %29 = memref.load %arg1[%c29] : memref<136xf32, #tpu.memory_space<smem>>
    %c30 = arith.constant 30 : index
    %30 = memref.load %arg1[%c30] : memref<136xf32, #tpu.memory_space<smem>>
    %c31 = arith.constant 31 : index
    %31 = memref.load %arg1[%c31] : memref<136xf32, #tpu.memory_space<smem>>
    %c32 = arith.constant 32 : index
    %32 = memref.load %arg1[%c32] : memref<136xf32, #tpu.memory_space<smem>>
    %c33 = arith.constant 33 : index
    %33 = memref.load %arg1[%c33] : memref<136xf32, #tpu.memory_space<smem>>
    %c34 = arith.constant 34 : index
    %34 = memref.load %arg1[%c34] : memref<136xf32, #tpu.memory_space<smem>>
    %c35 = arith.constant 35 : index
    %35 = memref.load %arg1[%c35] : memref<136xf32, #tpu.memory_space<smem>>
    %c36 = arith.constant 36 : index
    %36 = memref.load %arg1[%c36] : memref<136xf32, #tpu.memory_space<smem>>
    %c37 = arith.constant 37 : index
    %37 = memref.load %arg1[%c37] : memref<136xf32, #tpu.memory_space<smem>>
    %c38 = arith.constant 38 : index
    %38 = memref.load %arg1[%c38] : memref<136xf32, #tpu.memory_space<smem>>
    %c39 = arith.constant 39 : index
    %39 = memref.load %arg1[%c39] : memref<136xf32, #tpu.memory_space<smem>>
    %c40 = arith.constant 40 : index
    %40 = memref.load %arg1[%c40] : memref<136xf32, #tpu.memory_space<smem>>
    %c41 = arith.constant 41 : index
    %41 = memref.load %arg1[%c41] : memref<136xf32, #tpu.memory_space<smem>>
    %c42 = arith.constant 42 : index
    %42 = memref.load %arg1[%c42] : memref<136xf32, #tpu.memory_space<smem>>
    %c43 = arith.constant 43 : index
    %43 = memref.load %arg1[%c43] : memref<136xf32, #tpu.memory_space<smem>>
    %c44 = arith.constant 44 : index
    %44 = memref.load %arg1[%c44] : memref<136xf32, #tpu.memory_space<smem>>
    %c45 = arith.constant 45 : index
    %45 = memref.load %arg1[%c45] : memref<136xf32, #tpu.memory_space<smem>>
    %c46 = arith.constant 46 : index
    %46 = memref.load %arg1[%c46] : memref<136xf32, #tpu.memory_space<smem>>
    %c47 = arith.constant 47 : index
    %47 = memref.load %arg1[%c47] : memref<136xf32, #tpu.memory_space<smem>>
    %c48 = arith.constant 48 : index
    %48 = memref.load %arg1[%c48] : memref<136xf32, #tpu.memory_space<smem>>
    %c49 = arith.constant 49 : index
    %49 = memref.load %arg1[%c49] : memref<136xf32, #tpu.memory_space<smem>>
    %c50 = arith.constant 50 : index
    %50 = memref.load %arg1[%c50] : memref<136xf32, #tpu.memory_space<smem>>
    %c51 = arith.constant 51 : index
    %51 = memref.load %arg1[%c51] : memref<136xf32, #tpu.memory_space<smem>>
    %c52 = arith.constant 52 : index
    %52 = memref.load %arg1[%c52] : memref<136xf32, #tpu.memory_space<smem>>
    %c53 = arith.constant 53 : index
    %53 = memref.load %arg1[%c53] : memref<136xf32, #tpu.memory_space<smem>>
    %c54 = arith.constant 54 : index
    %54 = memref.load %arg1[%c54] : memref<136xf32, #tpu.memory_space<smem>>
    %c55 = arith.constant 55 : index
    %55 = memref.load %arg1[%c55] : memref<136xf32, #tpu.memory_space<smem>>
    %c56 = arith.constant 56 : index
    %56 = memref.load %arg1[%c56] : memref<136xf32, #tpu.memory_space<smem>>
    %c57 = arith.constant 57 : index
    %57 = memref.load %arg1[%c57] : memref<136xf32, #tpu.memory_space<smem>>
    %c58 = arith.constant 58 : index
    %58 = memref.load %arg1[%c58] : memref<136xf32, #tpu.memory_space<smem>>
    %c59 = arith.constant 59 : index
    %59 = memref.load %arg1[%c59] : memref<136xf32, #tpu.memory_space<smem>>
    %c60 = arith.constant 60 : index
    %60 = memref.load %arg1[%c60] : memref<136xf32, #tpu.memory_space<smem>>
    %c61 = arith.constant 61 : index
    %61 = memref.load %arg1[%c61] : memref<136xf32, #tpu.memory_space<smem>>
    %c62 = arith.constant 62 : index
    %62 = memref.load %arg1[%c62] : memref<136xf32, #tpu.memory_space<smem>>
    %c63 = arith.constant 63 : index
    %63 = memref.load %arg1[%c63] : memref<136xf32, #tpu.memory_space<smem>>
    %c64 = arith.constant 64 : index
    %64 = memref.load %arg1[%c64] : memref<136xf32, #tpu.memory_space<smem>>
    %c65 = arith.constant 65 : index
    %65 = memref.load %arg1[%c65] : memref<136xf32, #tpu.memory_space<smem>>
    %c66 = arith.constant 66 : index
    %66 = memref.load %arg1[%c66] : memref<136xf32, #tpu.memory_space<smem>>
    %c67 = arith.constant 67 : index
    %67 = memref.load %arg1[%c67] : memref<136xf32, #tpu.memory_space<smem>>
    %c68 = arith.constant 68 : index
    %68 = memref.load %arg1[%c68] : memref<136xf32, #tpu.memory_space<smem>>
    %c69 = arith.constant 69 : index
    %69 = memref.load %arg1[%c69] : memref<136xf32, #tpu.memory_space<smem>>
    %c70 = arith.constant 70 : index
    %70 = memref.load %arg1[%c70] : memref<136xf32, #tpu.memory_space<smem>>
    %c71 = arith.constant 71 : index
    %71 = memref.load %arg1[%c71] : memref<136xf32, #tpu.memory_space<smem>>
    %c72 = arith.constant 72 : index
    %72 = memref.load %arg1[%c72] : memref<136xf32, #tpu.memory_space<smem>>
    %c73 = arith.constant 73 : index
    %73 = memref.load %arg1[%c73] : memref<136xf32, #tpu.memory_space<smem>>
    %c74 = arith.constant 74 : index
    %74 = memref.load %arg1[%c74] : memref<136xf32, #tpu.memory_space<smem>>
    %c75 = arith.constant 75 : index
    %75 = memref.load %arg1[%c75] : memref<136xf32, #tpu.memory_space<smem>>
    %c76 = arith.constant 76 : index
    %76 = memref.load %arg1[%c76] : memref<136xf32, #tpu.memory_space<smem>>
    %c77 = arith.constant 77 : index
    %77 = memref.load %arg1[%c77] : memref<136xf32, #tpu.memory_space<smem>>
    %c78 = arith.constant 78 : index
    %78 = memref.load %arg1[%c78] : memref<136xf32, #tpu.memory_space<smem>>
    %c79 = arith.constant 79 : index
    %79 = memref.load %arg1[%c79] : memref<136xf32, #tpu.memory_space<smem>>
    %c80 = arith.constant 80 : index
    %80 = memref.load %arg1[%c80] : memref<136xf32, #tpu.memory_space<smem>>
    %c81 = arith.constant 81 : index
    %81 = memref.load %arg1[%c81] : memref<136xf32, #tpu.memory_space<smem>>
    %c82 = arith.constant 82 : index
    %82 = memref.load %arg1[%c82] : memref<136xf32, #tpu.memory_space<smem>>
    %c83 = arith.constant 83 : index
    %83 = memref.load %arg1[%c83] : memref<136xf32, #tpu.memory_space<smem>>
    %c84 = arith.constant 84 : index
    %84 = memref.load %arg1[%c84] : memref<136xf32, #tpu.memory_space<smem>>
    %c85 = arith.constant 85 : index
    %85 = memref.load %arg1[%c85] : memref<136xf32, #tpu.memory_space<smem>>
    %c86 = arith.constant 86 : index
    %86 = memref.load %arg1[%c86] : memref<136xf32, #tpu.memory_space<smem>>
    %c87 = arith.constant 87 : index
    %87 = memref.load %arg1[%c87] : memref<136xf32, #tpu.memory_space<smem>>
    %c88 = arith.constant 88 : index
    %88 = memref.load %arg1[%c88] : memref<136xf32, #tpu.memory_space<smem>>
    %c89 = arith.constant 89 : index
    %89 = memref.load %arg1[%c89] : memref<136xf32, #tpu.memory_space<smem>>
    %c90 = arith.constant 90 : index
    %90 = memref.load %arg1[%c90] : memref<136xf32, #tpu.memory_space<smem>>
    %c91 = arith.constant 91 : index
    %91 = memref.load %arg1[%c91] : memref<136xf32, #tpu.memory_space<smem>>
    %c92 = arith.constant 92 : index
    %92 = memref.load %arg1[%c92] : memref<136xf32, #tpu.memory_space<smem>>
    %c93 = arith.constant 93 : index
    %93 = memref.load %arg1[%c93] : memref<136xf32, #tpu.memory_space<smem>>
    %c94 = arith.constant 94 : index
    %94 = memref.load %arg1[%c94] : memref<136xf32, #tpu.memory_space<smem>>
    %c95 = arith.constant 95 : index
    %95 = memref.load %arg1[%c95] : memref<136xf32, #tpu.memory_space<smem>>
    %c96 = arith.constant 96 : index
    %96 = memref.load %arg1[%c96] : memref<136xf32, #tpu.memory_space<smem>>
    %c97 = arith.constant 97 : index
    %97 = memref.load %arg1[%c97] : memref<136xf32, #tpu.memory_space<smem>>
    %c98 = arith.constant 98 : index
    %98 = memref.load %arg1[%c98] : memref<136xf32, #tpu.memory_space<smem>>
    %c99 = arith.constant 99 : index
    %99 = memref.load %arg1[%c99] : memref<136xf32, #tpu.memory_space<smem>>
    %c100 = arith.constant 100 : index
    %100 = memref.load %arg1[%c100] : memref<136xf32, #tpu.memory_space<smem>>
    %c101 = arith.constant 101 : index
    %101 = memref.load %arg1[%c101] : memref<136xf32, #tpu.memory_space<smem>>
    %c102 = arith.constant 102 : index
    %102 = memref.load %arg1[%c102] : memref<136xf32, #tpu.memory_space<smem>>
    %c103 = arith.constant 103 : index
    %103 = memref.load %arg1[%c103] : memref<136xf32, #tpu.memory_space<smem>>
    %c104 = arith.constant 104 : index
    %104 = memref.load %arg1[%c104] : memref<136xf32, #tpu.memory_space<smem>>
    %c105 = arith.constant 105 : index
    %105 = memref.load %arg1[%c105] : memref<136xf32, #tpu.memory_space<smem>>
    %c106 = arith.constant 106 : index
    %106 = memref.load %arg1[%c106] : memref<136xf32, #tpu.memory_space<smem>>
    %c107 = arith.constant 107 : index
    %107 = memref.load %arg1[%c107] : memref<136xf32, #tpu.memory_space<smem>>
    %c108 = arith.constant 108 : index
    %108 = memref.load %arg1[%c108] : memref<136xf32, #tpu.memory_space<smem>>
    %c109 = arith.constant 109 : index
    %109 = memref.load %arg1[%c109] : memref<136xf32, #tpu.memory_space<smem>>
    %c110 = arith.constant 110 : index
    %110 = memref.load %arg1[%c110] : memref<136xf32, #tpu.memory_space<smem>>
    %c111 = arith.constant 111 : index
    %111 = memref.load %arg1[%c111] : memref<136xf32, #tpu.memory_space<smem>>
    %c112 = arith.constant 112 : index
    %112 = memref.load %arg1[%c112] : memref<136xf32, #tpu.memory_space<smem>>
    %c113 = arith.constant 113 : index
    %113 = memref.load %arg1[%c113] : memref<136xf32, #tpu.memory_space<smem>>
    %c114 = arith.constant 114 : index
    %114 = memref.load %arg1[%c114] : memref<136xf32, #tpu.memory_space<smem>>
    %c115 = arith.constant 115 : index
    %115 = memref.load %arg1[%c115] : memref<136xf32, #tpu.memory_space<smem>>
    %c116 = arith.constant 116 : index
    %116 = memref.load %arg1[%c116] : memref<136xf32, #tpu.memory_space<smem>>
    %c117 = arith.constant 117 : index
    %117 = memref.load %arg1[%c117] : memref<136xf32, #tpu.memory_space<smem>>
    %c118 = arith.constant 118 : index
    %118 = memref.load %arg1[%c118] : memref<136xf32, #tpu.memory_space<smem>>
    %c119 = arith.constant 119 : index
    %119 = memref.load %arg1[%c119] : memref<136xf32, #tpu.memory_space<smem>>
    %c120 = arith.constant 120 : index
    %120 = memref.load %arg1[%c120] : memref<136xf32, #tpu.memory_space<smem>>
    %c121 = arith.constant 121 : index
    %121 = memref.load %arg1[%c121] : memref<136xf32, #tpu.memory_space<smem>>
    %c122 = arith.constant 122 : index
    %122 = memref.load %arg1[%c122] : memref<136xf32, #tpu.memory_space<smem>>
    %c123 = arith.constant 123 : index
    %123 = memref.load %arg1[%c123] : memref<136xf32, #tpu.memory_space<smem>>
    %c124 = arith.constant 124 : index
    %124 = memref.load %arg1[%c124] : memref<136xf32, #tpu.memory_space<smem>>
    %c125 = arith.constant 125 : index
    %125 = memref.load %arg1[%c125] : memref<136xf32, #tpu.memory_space<smem>>
    %c126 = arith.constant 126 : index
    %126 = memref.load %arg1[%c126] : memref<136xf32, #tpu.memory_space<smem>>
    %c127 = arith.constant 127 : index
    %127 = memref.load %arg1[%c127] : memref<136xf32, #tpu.memory_space<smem>>
    %c128 = arith.constant 128 : index
    %128 = memref.load %arg1[%c128] : memref<136xf32, #tpu.memory_space<smem>>
    %c129 = arith.constant 129 : index
    %129 = memref.load %arg1[%c129] : memref<136xf32, #tpu.memory_space<smem>>
    %c130 = arith.constant 130 : index
    %130 = memref.load %arg1[%c130] : memref<136xf32, #tpu.memory_space<smem>>
    %c131 = arith.constant 131 : index
    %131 = memref.load %arg1[%c131] : memref<136xf32, #tpu.memory_space<smem>>
    %c132 = arith.constant 132 : index
    %132 = memref.load %arg1[%c132] : memref<136xf32, #tpu.memory_space<smem>>
    %c133 = arith.constant 133 : index
    %133 = memref.load %arg1[%c133] : memref<136xf32, #tpu.memory_space<smem>>
    %c134 = arith.constant 134 : index
    %134 = memref.load %arg1[%c134] : memref<136xf32, #tpu.memory_space<smem>>
    %c135 = arith.constant 135 : index
    %135 = memref.load %arg1[%c135] : memref<136xf32, #tpu.memory_space<smem>>
    %c0_0 = arith.constant 0 : index
    %c0_1 = arith.constant 0 : index
    %c0_2 = arith.constant 0 : index
    %136 = vector.load %arg2[%c0_0, %c0_1, %c0_2] : memref<8x1x128xf32, #tpu.memory_space<vmem>>, vector<1x1x128xf32>
    %137 = vector.shape_cast %136 : vector<1x1x128xf32> to vector<1x128xf32>
    %c1_3 = arith.constant 1 : index
    %c0_4 = arith.constant 0 : index
    %c0_5 = arith.constant 0 : index
    %138 = vector.load %arg2[%c1_3, %c0_4, %c0_5] : memref<8x1x128xf32, #tpu.memory_space<vmem>>, vector<1x1x128xf32>
    %139 = vector.shape_cast %138 : vector<1x1x128xf32> to vector<1x128xf32>
    %c2_6 = arith.constant 2 : index
    %c0_7 = arith.constant 0 : index
    %c0_8 = arith.constant 0 : index
    %140 = vector.load %arg2[%c2_6, %c0_7, %c0_8] : memref<8x1x128xf32, #tpu.memory_space<vmem>>, vector<1x1x128xf32>
    %141 = vector.shape_cast %140 : vector<1x1x128xf32> to vector<1x128xf32>
    %c3_9 = arith.constant 3 : index
    %c0_10 = arith.constant 0 : index
    %c0_11 = arith.constant 0 : index
    %142 = vector.load %arg2[%c3_9, %c0_10, %c0_11] : memref<8x1x128xf32, #tpu.memory_space<vmem>>, vector<1x1x128xf32>
    %143 = vector.shape_cast %142 : vector<1x1x128xf32> to vector<1x128xf32>
    %c4_12 = arith.constant 4 : index
    %c0_13 = arith.constant 0 : index
    %c0_14 = arith.constant 0 : index
    %144 = vector.load %arg2[%c4_12, %c0_13, %c0_14] : memref<8x1x128xf32, #tpu.memory_space<vmem>>, vector<1x1x128xf32>
    %145 = vector.shape_cast %144 : vector<1x1x128xf32> to vector<1x128xf32>
    %c5_15 = arith.constant 5 : index
    %c0_16 = arith.constant 0 : index
    %c0_17 = arith.constant 0 : index
    %146 = vector.load %arg2[%c5_15, %c0_16, %c0_17] : memref<8x1x128xf32, #tpu.memory_space<vmem>>, vector<1x1x128xf32>
    %147 = vector.shape_cast %146 : vector<1x1x128xf32> to vector<1x128xf32>
    %c6_18 = arith.constant 6 : index
    %c0_19 = arith.constant 0 : index
    %c0_20 = arith.constant 0 : index
    %148 = vector.load %arg2[%c6_18, %c0_19, %c0_20] : memref<8x1x128xf32, #tpu.memory_space<vmem>>, vector<1x1x128xf32>
    %149 = vector.shape_cast %148 : vector<1x1x128xf32> to vector<1x128xf32>
    %c7_21 = arith.constant 7 : index
    %c0_22 = arith.constant 0 : index
    %c0_23 = arith.constant 0 : index
    %150 = vector.load %arg2[%c7_21, %c0_22, %c0_23] : memref<8x1x128xf32, #tpu.memory_space<vmem>>, vector<1x1x128xf32>
    %151 = vector.shape_cast %150 : vector<1x1x128xf32> to vector<1x128xf32>
    %152 = vector.broadcast %0 : f32 to vector<1x128xf32>
    %153 = arith.mulf %137, %152 : vector<1x128xf32>
    %154 = vector.broadcast %6 : f32 to vector<1x128xf32>
    %155 = arith.mulf %139, %154 : vector<1x128xf32>
    %156 = arith.addf %153, %155 : vector<1x128xf32>
    %157 = vector.broadcast %12 : f32 to vector<1x128xf32>
    %158 = arith.mulf %141, %157 : vector<1x128xf32>
    %159 = arith.addf %156, %158 : vector<1x128xf32>
    %160 = vector.broadcast %18 : f32 to vector<1x128xf32>
    %161 = arith.mulf %143, %160 : vector<1x128xf32>
    %162 = arith.addf %159, %161 : vector<1x128xf32>
    %163 = vector.broadcast %24 : f32 to vector<1x128xf32>
    %164 = arith.mulf %145, %163 : vector<1x128xf32>
    %165 = arith.addf %162, %164 : vector<1x128xf32>
    %166 = vector.broadcast %30 : f32 to vector<1x128xf32>
    %167 = arith.mulf %147, %166 : vector<1x128xf32>
    %168 = arith.addf %165, %167 : vector<1x128xf32>
    %169 = vector.broadcast %36 : f32 to vector<1x128xf32>
    %170 = arith.mulf %149, %169 : vector<1x128xf32>
    %171 = arith.addf %168, %170 : vector<1x128xf32>
    %172 = vector.broadcast %42 : f32 to vector<1x128xf32>
    %173 = arith.mulf %151, %172 : vector<1x128xf32>
    %174 = arith.addf %171, %173 : vector<1x128xf32>
    %175 = vector.broadcast %48 : f32 to vector<1x128xf32>
    %176 = arith.addf %174, %175 : vector<1x128xf32>
    %cst = arith.constant 0.00999999977 : f32
    %177 = vector.broadcast %cst : f32 to vector<1x128xf32>
    %178 = arith.mulf %177, %176 : vector<1x128xf32>
    %179 = arith.maximumf %176, %178 : vector<1x128xf32>
    %180 = vector.broadcast %1 : f32 to vector<1x128xf32>
    %181 = arith.mulf %137, %180 : vector<1x128xf32>
    %182 = vector.broadcast %7 : f32 to vector<1x128xf32>
    %183 = arith.mulf %139, %182 : vector<1x128xf32>
    %184 = arith.addf %181, %183 : vector<1x128xf32>
    %185 = vector.broadcast %13 : f32 to vector<1x128xf32>
    %186 = arith.mulf %141, %185 : vector<1x128xf32>
    %187 = arith.addf %184, %186 : vector<1x128xf32>
    %188 = vector.broadcast %19 : f32 to vector<1x128xf32>
    %189 = arith.mulf %143, %188 : vector<1x128xf32>
    %190 = arith.addf %187, %189 : vector<1x128xf32>
    %191 = vector.broadcast %25 : f32 to vector<1x128xf32>
    %192 = arith.mulf %145, %191 : vector<1x128xf32>
    %193 = arith.addf %190, %192 : vector<1x128xf32>
    %194 = vector.broadcast %31 : f32 to vector<1x128xf32>
    %195 = arith.mulf %147, %194 : vector<1x128xf32>
    %196 = arith.addf %193, %195 : vector<1x128xf32>
    %197 = vector.broadcast %37 : f32 to vector<1x128xf32>
    %198 = arith.mulf %149, %197 : vector<1x128xf32>
    %199 = arith.addf %196, %198 : vector<1x128xf32>
    %200 = vector.broadcast %43 : f32 to vector<1x128xf32>
    %201 = arith.mulf %151, %200 : vector<1x128xf32>
    %202 = arith.addf %199, %201 : vector<1x128xf32>
    %203 = vector.broadcast %49 : f32 to vector<1x128xf32>
    %204 = arith.addf %202, %203 : vector<1x128xf32>
    %cst_24 = arith.constant 0.00999999977 : f32
    %205 = vector.broadcast %cst_24 : f32 to vector<1x128xf32>
    %206 = arith.mulf %205, %204 : vector<1x128xf32>
    %207 = arith.maximumf %204, %206 : vector<1x128xf32>
    %208 = vector.broadcast %2 : f32 to vector<1x128xf32>
    %209 = arith.mulf %137, %208 : vector<1x128xf32>
    %210 = vector.broadcast %8 : f32 to vector<1x128xf32>
    %211 = arith.mulf %139, %210 : vector<1x128xf32>
    %212 = arith.addf %209, %211 : vector<1x128xf32>
    %213 = vector.broadcast %14 : f32 to vector<1x128xf32>
    %214 = arith.mulf %141, %213 : vector<1x128xf32>
    %215 = arith.addf %212, %214 : vector<1x128xf32>
    %216 = vector.broadcast %20 : f32 to vector<1x128xf32>
    %217 = arith.mulf %143, %216 : vector<1x128xf32>
    %218 = arith.addf %215, %217 : vector<1x128xf32>
    %219 = vector.broadcast %26 : f32 to vector<1x128xf32>
    %220 = arith.mulf %145, %219 : vector<1x128xf32>
    %221 = arith.addf %218, %220 : vector<1x128xf32>
    %222 = vector.broadcast %32 : f32 to vector<1x128xf32>
    %223 = arith.mulf %147, %222 : vector<1x128xf32>
    %224 = arith.addf %221, %223 : vector<1x128xf32>
    %225 = vector.broadcast %38 : f32 to vector<1x128xf32>
    %226 = arith.mulf %149, %225 : vector<1x128xf32>
    %227 = arith.addf %224, %226 : vector<1x128xf32>
    %228 = vector.broadcast %44 : f32 to vector<1x128xf32>
    %229 = arith.mulf %151, %228 : vector<1x128xf32>
    %230 = arith.addf %227, %229 : vector<1x128xf32>
    %231 = vector.broadcast %50 : f32 to vector<1x128xf32>
    %232 = arith.addf %230, %231 : vector<1x128xf32>
    %cst_25 = arith.constant 0.00999999977 : f32
    %233 = vector.broadcast %cst_25 : f32 to vector<1x128xf32>
    %234 = arith.mulf %233, %232 : vector<1x128xf32>
    %235 = arith.maximumf %232, %234 : vector<1x128xf32>
    %236 = vector.broadcast %3 : f32 to vector<1x128xf32>
    %237 = arith.mulf %137, %236 : vector<1x128xf32>
    %238 = vector.broadcast %9 : f32 to vector<1x128xf32>
    %239 = arith.mulf %139, %238 : vector<1x128xf32>
    %240 = arith.addf %237, %239 : vector<1x128xf32>
    %241 = vector.broadcast %15 : f32 to vector<1x128xf32>
    %242 = arith.mulf %141, %241 : vector<1x128xf32>
    %243 = arith.addf %240, %242 : vector<1x128xf32>
    %244 = vector.broadcast %21 : f32 to vector<1x128xf32>
    %245 = arith.mulf %143, %244 : vector<1x128xf32>
    %246 = arith.addf %243, %245 : vector<1x128xf32>
    %247 = vector.broadcast %27 : f32 to vector<1x128xf32>
    %248 = arith.mulf %145, %247 : vector<1x128xf32>
    %249 = arith.addf %246, %248 : vector<1x128xf32>
    %250 = vector.broadcast %33 : f32 to vector<1x128xf32>
    %251 = arith.mulf %147, %250 : vector<1x128xf32>
    %252 = arith.addf %249, %251 : vector<1x128xf32>
    %253 = vector.broadcast %39 : f32 to vector<1x128xf32>
    %254 = arith.mulf %149, %253 : vector<1x128xf32>
    %255 = arith.addf %252, %254 : vector<1x128xf32>
    %256 = vector.broadcast %45 : f32 to vector<1x128xf32>
    %257 = arith.mulf %151, %256 : vector<1x128xf32>
    %258 = arith.addf %255, %257 : vector<1x128xf32>
    %259 = vector.broadcast %51 : f32 to vector<1x128xf32>
    %260 = arith.addf %258, %259 : vector<1x128xf32>
    %cst_26 = arith.constant 0.00999999977 : f32
    %261 = vector.broadcast %cst_26 : f32 to vector<1x128xf32>
    %262 = arith.mulf %261, %260 : vector<1x128xf32>
    %263 = arith.maximumf %260, %262 : vector<1x128xf32>
    %264 = vector.broadcast %4 : f32 to vector<1x128xf32>
    %265 = arith.mulf %137, %264 : vector<1x128xf32>
    %266 = vector.broadcast %10 : f32 to vector<1x128xf32>
    %267 = arith.mulf %139, %266 : vector<1x128xf32>
    %268 = arith.addf %265, %267 : vector<1x128xf32>
    %269 = vector.broadcast %16 : f32 to vector<1x128xf32>
    %270 = arith.mulf %141, %269 : vector<1x128xf32>
    %271 = arith.addf %268, %270 : vector<1x128xf32>
    %272 = vector.broadcast %22 : f32 to vector<1x128xf32>
    %273 = arith.mulf %143, %272 : vector<1x128xf32>
    %274 = arith.addf %271, %273 : vector<1x128xf32>
    %275 = vector.broadcast %28 : f32 to vector<1x128xf32>
    %276 = arith.mulf %145, %275 : vector<1x128xf32>
    %277 = arith.addf %274, %276 : vector<1x128xf32>
    %278 = vector.broadcast %34 : f32 to vector<1x128xf32>
    %279 = arith.mulf %147, %278 : vector<1x128xf32>
    %280 = arith.addf %277, %279 : vector<1x128xf32>
    %281 = vector.broadcast %40 : f32 to vector<1x128xf32>
    %282 = arith.mulf %149, %281 : vector<1x128xf32>
    %283 = arith.addf %280, %282 : vector<1x128xf32>
    %284 = vector.broadcast %46 : f32 to vector<1x128xf32>
    %285 = arith.mulf %151, %284 : vector<1x128xf32>
    %286 = arith.addf %283, %285 : vector<1x128xf32>
    %287 = vector.broadcast %52 : f32 to vector<1x128xf32>
    %288 = arith.addf %286, %287 : vector<1x128xf32>
    %cst_27 = arith.constant 0.00999999977 : f32
    %289 = vector.broadcast %cst_27 : f32 to vector<1x128xf32>
    %290 = arith.mulf %289, %288 : vector<1x128xf32>
    %291 = arith.maximumf %288, %290 : vector<1x128xf32>
    %292 = vector.broadcast %5 : f32 to vector<1x128xf32>
    %293 = arith.mulf %137, %292 : vector<1x128xf32>
    %294 = vector.broadcast %11 : f32 to vector<1x128xf32>
    %295 = arith.mulf %139, %294 : vector<1x128xf32>
    %296 = arith.addf %293, %295 : vector<1x128xf32>
    %297 = vector.broadcast %17 : f32 to vector<1x128xf32>
    %298 = arith.mulf %141, %297 : vector<1x128xf32>
    %299 = arith.addf %296, %298 : vector<1x128xf32>
    %300 = vector.broadcast %23 : f32 to vector<1x128xf32>
    %301 = arith.mulf %143, %300 : vector<1x128xf32>
    %302 = arith.addf %299, %301 : vector<1x128xf32>
    %303 = vector.broadcast %29 : f32 to vector<1x128xf32>
    %304 = arith.mulf %145, %303 : vector<1x128xf32>
    %305 = arith.addf %302, %304 : vector<1x128xf32>
    %306 = vector.broadcast %35 : f32 to vector<1x128xf32>
    %307 = arith.mulf %147, %306 : vector<1x128xf32>
    %308 = arith.addf %305, %307 : vector<1x128xf32>
    %309 = vector.broadcast %41 : f32 to vector<1x128xf32>
    %310 = arith.mulf %149, %309 : vector<1x128xf32>
    %311 = arith.addf %308, %310 : vector<1x128xf32>
    %312 = vector.broadcast %47 : f32 to vector<1x128xf32>
    %313 = arith.mulf %151, %312 : vector<1x128xf32>
    %314 = arith.addf %311, %313 : vector<1x128xf32>
    %315 = vector.broadcast %53 : f32 to vector<1x128xf32>
    %316 = arith.addf %314, %315 : vector<1x128xf32>
    %cst_28 = arith.constant 0.00999999977 : f32
    %317 = vector.broadcast %cst_28 : f32 to vector<1x128xf32>
    %318 = arith.mulf %317, %316 : vector<1x128xf32>
    %319 = arith.maximumf %316, %318 : vector<1x128xf32>
    %320 = vector.broadcast %54 : f32 to vector<1x128xf32>
    %321 = arith.mulf %179, %320 : vector<1x128xf32>
    %322 = vector.broadcast %59 : f32 to vector<1x128xf32>
    %323 = arith.mulf %207, %322 : vector<1x128xf32>
    %324 = arith.addf %321, %323 : vector<1x128xf32>
    %325 = vector.broadcast %64 : f32 to vector<1x128xf32>
    %326 = arith.mulf %235, %325 : vector<1x128xf32>
    %327 = arith.addf %324, %326 : vector<1x128xf32>
    %328 = vector.broadcast %69 : f32 to vector<1x128xf32>
    %329 = arith.mulf %263, %328 : vector<1x128xf32>
    %330 = arith.addf %327, %329 : vector<1x128xf32>
    %331 = vector.broadcast %74 : f32 to vector<1x128xf32>
    %332 = arith.mulf %291, %331 : vector<1x128xf32>
    %333 = arith.addf %330, %332 : vector<1x128xf32>
    %334 = vector.broadcast %79 : f32 to vector<1x128xf32>
    %335 = arith.mulf %319, %334 : vector<1x128xf32>
    %336 = arith.addf %333, %335 : vector<1x128xf32>
    %337 = vector.broadcast %84 : f32 to vector<1x128xf32>
    %338 = arith.addf %336, %337 : vector<1x128xf32>
    %cst_29 = arith.constant 0.00999999977 : f32
    %339 = vector.broadcast %cst_29 : f32 to vector<1x128xf32>
    %340 = arith.mulf %339, %338 : vector<1x128xf32>
    %341 = arith.maximumf %338, %340 : vector<1x128xf32>
    %342 = vector.broadcast %55 : f32 to vector<1x128xf32>
    %343 = arith.mulf %179, %342 : vector<1x128xf32>
    %344 = vector.broadcast %60 : f32 to vector<1x128xf32>
    %345 = arith.mulf %207, %344 : vector<1x128xf32>
    %346 = arith.addf %343, %345 : vector<1x128xf32>
    %347 = vector.broadcast %65 : f32 to vector<1x128xf32>
    %348 = arith.mulf %235, %347 : vector<1x128xf32>
    %349 = arith.addf %346, %348 : vector<1x128xf32>
    %350 = vector.broadcast %70 : f32 to vector<1x128xf32>
    %351 = arith.mulf %263, %350 : vector<1x128xf32>
    %352 = arith.addf %349, %351 : vector<1x128xf32>
    %353 = vector.broadcast %75 : f32 to vector<1x128xf32>
    %354 = arith.mulf %291, %353 : vector<1x128xf32>
    %355 = arith.addf %352, %354 : vector<1x128xf32>
    %356 = vector.broadcast %80 : f32 to vector<1x128xf32>
    %357 = arith.mulf %319, %356 : vector<1x128xf32>
    %358 = arith.addf %355, %357 : vector<1x128xf32>
    %359 = vector.broadcast %85 : f32 to vector<1x128xf32>
    %360 = arith.addf %358, %359 : vector<1x128xf32>
    %cst_30 = arith.constant 0.00999999977 : f32
    %361 = vector.broadcast %cst_30 : f32 to vector<1x128xf32>
    %362 = arith.mulf %361, %360 : vector<1x128xf32>
    %363 = arith.maximumf %360, %362 : vector<1x128xf32>
    %364 = vector.broadcast %56 : f32 to vector<1x128xf32>
    %365 = arith.mulf %179, %364 : vector<1x128xf32>
    %366 = vector.broadcast %61 : f32 to vector<1x128xf32>
    %367 = arith.mulf %207, %366 : vector<1x128xf32>
    %368 = arith.addf %365, %367 : vector<1x128xf32>
    %369 = vector.broadcast %66 : f32 to vector<1x128xf32>
    %370 = arith.mulf %235, %369 : vector<1x128xf32>
    %371 = arith.addf %368, %370 : vector<1x128xf32>
    %372 = vector.broadcast %71 : f32 to vector<1x128xf32>
    %373 = arith.mulf %263, %372 : vector<1x128xf32>
    %374 = arith.addf %371, %373 : vector<1x128xf32>
    %375 = vector.broadcast %76 : f32 to vector<1x128xf32>
    %376 = arith.mulf %291, %375 : vector<1x128xf32>
    %377 = arith.addf %374, %376 : vector<1x128xf32>
    %378 = vector.broadcast %81 : f32 to vector<1x128xf32>
    %379 = arith.mulf %319, %378 : vector<1x128xf32>
    %380 = arith.addf %377, %379 : vector<1x128xf32>
    %381 = vector.broadcast %86 : f32 to vector<1x128xf32>
    %382 = arith.addf %380, %381 : vector<1x128xf32>
    %cst_31 = arith.constant 0.00999999977 : f32
    %383 = vector.broadcast %cst_31 : f32 to vector<1x128xf32>
    %384 = arith.mulf %383, %382 : vector<1x128xf32>
    %385 = arith.maximumf %382, %384 : vector<1x128xf32>
    %386 = vector.broadcast %57 : f32 to vector<1x128xf32>
    %387 = arith.mulf %179, %386 : vector<1x128xf32>
    %388 = vector.broadcast %62 : f32 to vector<1x128xf32>
    %389 = arith.mulf %207, %388 : vector<1x128xf32>
    %390 = arith.addf %387, %389 : vector<1x128xf32>
    %391 = vector.broadcast %67 : f32 to vector<1x128xf32>
    %392 = arith.mulf %235, %391 : vector<1x128xf32>
    %393 = arith.addf %390, %392 : vector<1x128xf32>
    %394 = vector.broadcast %72 : f32 to vector<1x128xf32>
    %395 = arith.mulf %263, %394 : vector<1x128xf32>
    %396 = arith.addf %393, %395 : vector<1x128xf32>
    %397 = vector.broadcast %77 : f32 to vector<1x128xf32>
    %398 = arith.mulf %291, %397 : vector<1x128xf32>
    %399 = arith.addf %396, %398 : vector<1x128xf32>
    %400 = vector.broadcast %82 : f32 to vector<1x128xf32>
    %401 = arith.mulf %319, %400 : vector<1x128xf32>
    %402 = arith.addf %399, %401 : vector<1x128xf32>
    %403 = vector.broadcast %87 : f32 to vector<1x128xf32>
    %404 = arith.addf %402, %403 : vector<1x128xf32>
    %cst_32 = arith.constant 0.00999999977 : f32
    %405 = vector.broadcast %cst_32 : f32 to vector<1x128xf32>
    %406 = arith.mulf %405, %404 : vector<1x128xf32>
    %407 = arith.maximumf %404, %406 : vector<1x128xf32>
    %408 = vector.broadcast %58 : f32 to vector<1x128xf32>
    %409 = arith.mulf %179, %408 : vector<1x128xf32>
    %410 = vector.broadcast %63 : f32 to vector<1x128xf32>
    %411 = arith.mulf %207, %410 : vector<1x128xf32>
    %412 = arith.addf %409, %411 : vector<1x128xf32>
    %413 = vector.broadcast %68 : f32 to vector<1x128xf32>
    %414 = arith.mulf %235, %413 : vector<1x128xf32>
    %415 = arith.addf %412, %414 : vector<1x128xf32>
    %416 = vector.broadcast %73 : f32 to vector<1x128xf32>
    %417 = arith.mulf %263, %416 : vector<1x128xf32>
    %418 = arith.addf %415, %417 : vector<1x128xf32>
    %419 = vector.broadcast %78 : f32 to vector<1x128xf32>
    %420 = arith.mulf %291, %419 : vector<1x128xf32>
    %421 = arith.addf %418, %420 : vector<1x128xf32>
    %422 = vector.broadcast %83 : f32 to vector<1x128xf32>
    %423 = arith.mulf %319, %422 : vector<1x128xf32>
    %424 = arith.addf %421, %423 : vector<1x128xf32>
    %425 = vector.broadcast %88 : f32 to vector<1x128xf32>
    %426 = arith.addf %424, %425 : vector<1x128xf32>
    %cst_33 = arith.constant 0.00999999977 : f32
    %427 = vector.broadcast %cst_33 : f32 to vector<1x128xf32>
    %428 = arith.mulf %427, %426 : vector<1x128xf32>
    %429 = arith.maximumf %426, %428 : vector<1x128xf32>
    %430 = vector.broadcast %89 : f32 to vector<1x128xf32>
    %431 = arith.mulf %341, %430 : vector<1x128xf32>
    %432 = vector.broadcast %93 : f32 to vector<1x128xf32>
    %433 = arith.mulf %363, %432 : vector<1x128xf32>
    %434 = arith.addf %431, %433 : vector<1x128xf32>
    %435 = vector.broadcast %97 : f32 to vector<1x128xf32>
    %436 = arith.mulf %385, %435 : vector<1x128xf32>
    %437 = arith.addf %434, %436 : vector<1x128xf32>
    %438 = vector.broadcast %101 : f32 to vector<1x128xf32>
    %439 = arith.mulf %407, %438 : vector<1x128xf32>
    %440 = arith.addf %437, %439 : vector<1x128xf32>
    %441 = vector.broadcast %105 : f32 to vector<1x128xf32>
    %442 = arith.mulf %429, %441 : vector<1x128xf32>
    %443 = arith.addf %440, %442 : vector<1x128xf32>
    %444 = vector.broadcast %109 : f32 to vector<1x128xf32>
    %445 = arith.addf %443, %444 : vector<1x128xf32>
    %cst_34 = arith.constant 0.00999999977 : f32
    %446 = vector.broadcast %cst_34 : f32 to vector<1x128xf32>
    %447 = arith.mulf %446, %445 : vector<1x128xf32>
    %448 = arith.maximumf %445, %447 : vector<1x128xf32>
    %449 = vector.broadcast %90 : f32 to vector<1x128xf32>
    %450 = arith.mulf %341, %449 : vector<1x128xf32>
    %451 = vector.broadcast %94 : f32 to vector<1x128xf32>
    %452 = arith.mulf %363, %451 : vector<1x128xf32>
    %453 = arith.addf %450, %452 : vector<1x128xf32>
    %454 = vector.broadcast %98 : f32 to vector<1x128xf32>
    %455 = arith.mulf %385, %454 : vector<1x128xf32>
    %456 = arith.addf %453, %455 : vector<1x128xf32>
    %457 = vector.broadcast %102 : f32 to vector<1x128xf32>
    %458 = arith.mulf %407, %457 : vector<1x128xf32>
    %459 = arith.addf %456, %458 : vector<1x128xf32>
    %460 = vector.broadcast %106 : f32 to vector<1x128xf32>
    %461 = arith.mulf %429, %460 : vector<1x128xf32>
    %462 = arith.addf %459, %461 : vector<1x128xf32>
    %463 = vector.broadcast %110 : f32 to vector<1x128xf32>
    %464 = arith.addf %462, %463 : vector<1x128xf32>
    %cst_35 = arith.constant 0.00999999977 : f32
    %465 = vector.broadcast %cst_35 : f32 to vector<1x128xf32>
    %466 = arith.mulf %465, %464 : vector<1x128xf32>
    %467 = arith.maximumf %464, %466 : vector<1x128xf32>
    %468 = vector.broadcast %91 : f32 to vector<1x128xf32>
    %469 = arith.mulf %341, %468 : vector<1x128xf32>
    %470 = vector.broadcast %95 : f32 to vector<1x128xf32>
    %471 = arith.mulf %363, %470 : vector<1x128xf32>
    %472 = arith.addf %469, %471 : vector<1x128xf32>
    %473 = vector.broadcast %99 : f32 to vector<1x128xf32>
    %474 = arith.mulf %385, %473 : vector<1x128xf32>
    %475 = arith.addf %472, %474 : vector<1x128xf32>
    %476 = vector.broadcast %103 : f32 to vector<1x128xf32>
    %477 = arith.mulf %407, %476 : vector<1x128xf32>
    %478 = arith.addf %475, %477 : vector<1x128xf32>
    %479 = vector.broadcast %107 : f32 to vector<1x128xf32>
    %480 = arith.mulf %429, %479 : vector<1x128xf32>
    %481 = arith.addf %478, %480 : vector<1x128xf32>
    %482 = vector.broadcast %111 : f32 to vector<1x128xf32>
    %483 = arith.addf %481, %482 : vector<1x128xf32>
    %cst_36 = arith.constant 0.00999999977 : f32
    %484 = vector.broadcast %cst_36 : f32 to vector<1x128xf32>
    %485 = arith.mulf %484, %483 : vector<1x128xf32>
    %486 = arith.maximumf %483, %485 : vector<1x128xf32>
    %487 = vector.broadcast %92 : f32 to vector<1x128xf32>
    %488 = arith.mulf %341, %487 : vector<1x128xf32>
    %489 = vector.broadcast %96 : f32 to vector<1x128xf32>
    %490 = arith.mulf %363, %489 : vector<1x128xf32>
    %491 = arith.addf %488, %490 : vector<1x128xf32>
    %492 = vector.broadcast %100 : f32 to vector<1x128xf32>
    %493 = arith.mulf %385, %492 : vector<1x128xf32>
    %494 = arith.addf %491, %493 : vector<1x128xf32>
    %495 = vector.broadcast %104 : f32 to vector<1x128xf32>
    %496 = arith.mulf %407, %495 : vector<1x128xf32>
    %497 = arith.addf %494, %496 : vector<1x128xf32>
    %498 = vector.broadcast %108 : f32 to vector<1x128xf32>
    %499 = arith.mulf %429, %498 : vector<1x128xf32>
    %500 = arith.addf %497, %499 : vector<1x128xf32>
    %501 = vector.broadcast %112 : f32 to vector<1x128xf32>
    %502 = arith.addf %500, %501 : vector<1x128xf32>
    %cst_37 = arith.constant 0.00999999977 : f32
    %503 = vector.broadcast %cst_37 : f32 to vector<1x128xf32>
    %504 = arith.mulf %503, %502 : vector<1x128xf32>
    %505 = arith.maximumf %502, %504 : vector<1x128xf32>
    %506 = vector.broadcast %113 : f32 to vector<1x128xf32>
    %507 = arith.mulf %448, %506 : vector<1x128xf32>
    %508 = vector.broadcast %116 : f32 to vector<1x128xf32>
    %509 = arith.mulf %467, %508 : vector<1x128xf32>
    %510 = arith.addf %507, %509 : vector<1x128xf32>
    %511 = vector.broadcast %119 : f32 to vector<1x128xf32>
    %512 = arith.mulf %486, %511 : vector<1x128xf32>
    %513 = arith.addf %510, %512 : vector<1x128xf32>
    %514 = vector.broadcast %122 : f32 to vector<1x128xf32>
    %515 = arith.mulf %505, %514 : vector<1x128xf32>
    %516 = arith.addf %513, %515 : vector<1x128xf32>
    %517 = vector.broadcast %125 : f32 to vector<1x128xf32>
    %518 = arith.addf %516, %517 : vector<1x128xf32>
    %cst_38 = arith.constant 0.00999999977 : f32
    %519 = vector.broadcast %cst_38 : f32 to vector<1x128xf32>
    %520 = arith.mulf %519, %518 : vector<1x128xf32>
    %521 = arith.maximumf %518, %520 : vector<1x128xf32>
    %522 = vector.broadcast %114 : f32 to vector<1x128xf32>
    %523 = arith.mulf %448, %522 : vector<1x128xf32>
    %524 = vector.broadcast %117 : f32 to vector<1x128xf32>
    %525 = arith.mulf %467, %524 : vector<1x128xf32>
    %526 = arith.addf %523, %525 : vector<1x128xf32>
    %527 = vector.broadcast %120 : f32 to vector<1x128xf32>
    %528 = arith.mulf %486, %527 : vector<1x128xf32>
    %529 = arith.addf %526, %528 : vector<1x128xf32>
    %530 = vector.broadcast %123 : f32 to vector<1x128xf32>
    %531 = arith.mulf %505, %530 : vector<1x128xf32>
    %532 = arith.addf %529, %531 : vector<1x128xf32>
    %533 = vector.broadcast %126 : f32 to vector<1x128xf32>
    %534 = arith.addf %532, %533 : vector<1x128xf32>
    %cst_39 = arith.constant 0.00999999977 : f32
    %535 = vector.broadcast %cst_39 : f32 to vector<1x128xf32>
    %536 = arith.mulf %535, %534 : vector<1x128xf32>
    %537 = arith.maximumf %534, %536 : vector<1x128xf32>
    %538 = vector.broadcast %115 : f32 to vector<1x128xf32>
    %539 = arith.mulf %448, %538 : vector<1x128xf32>
    %540 = vector.broadcast %118 : f32 to vector<1x128xf32>
    %541 = arith.mulf %467, %540 : vector<1x128xf32>
    %542 = arith.addf %539, %541 : vector<1x128xf32>
    %543 = vector.broadcast %121 : f32 to vector<1x128xf32>
    %544 = arith.mulf %486, %543 : vector<1x128xf32>
    %545 = arith.addf %542, %544 : vector<1x128xf32>
    %546 = vector.broadcast %124 : f32 to vector<1x128xf32>
    %547 = arith.mulf %505, %546 : vector<1x128xf32>
    %548 = arith.addf %545, %547 : vector<1x128xf32>
    %549 = vector.broadcast %127 : f32 to vector<1x128xf32>
    %550 = arith.addf %548, %549 : vector<1x128xf32>
    %cst_40 = arith.constant 0.00999999977 : f32
    %551 = vector.broadcast %cst_40 : f32 to vector<1x128xf32>
    %552 = arith.mulf %551, %550 : vector<1x128xf32>
    %553 = arith.maximumf %550, %552 : vector<1x128xf32>
    %554 = vector.broadcast %128 : f32 to vector<1x128xf32>
    %555 = arith.mulf %521, %554 : vector<1x128xf32>
    %556 = vector.broadcast %130 : f32 to vector<1x128xf32>
    %557 = arith.mulf %537, %556 : vector<1x128xf32>
    %558 = arith.addf %555, %557 : vector<1x128xf32>
    %559 = vector.broadcast %132 : f32 to vector<1x128xf32>
    %560 = arith.mulf %553, %559 : vector<1x128xf32>
    %561 = arith.addf %558, %560 : vector<1x128xf32>
    %562 = vector.broadcast %134 : f32 to vector<1x128xf32>
    %563 = arith.addf %561, %562 : vector<1x128xf32>
    %564 = arith.negf %563 : vector<1x128xf32>
    %565 = math.exp %564 : vector<1x128xf32>
    %cst_41 = arith.constant 1.000000e+00 : f32
    %566 = vector.broadcast %cst_41 : f32 to vector<1x128xf32>
    %567 = arith.addf %566, %565 : vector<1x128xf32>
    %568 = arith.divf %566, %567 : vector<1x128xf32>
    %569 = vector.broadcast %129 : f32 to vector<1x128xf32>
    %570 = arith.mulf %521, %569 : vector<1x128xf32>
    %571 = vector.broadcast %131 : f32 to vector<1x128xf32>
    %572 = arith.mulf %537, %571 : vector<1x128xf32>
    %573 = arith.addf %570, %572 : vector<1x128xf32>
    %574 = vector.broadcast %133 : f32 to vector<1x128xf32>
    %575 = arith.mulf %553, %574 : vector<1x128xf32>
    %576 = arith.addf %573, %575 : vector<1x128xf32>
    %577 = vector.broadcast %135 : f32 to vector<1x128xf32>
    %578 = arith.addf %576, %577 : vector<1x128xf32>
    %579 = arith.negf %578 : vector<1x128xf32>
    %580 = math.exp %579 : vector<1x128xf32>
    %cst_42 = arith.constant 1.000000e+00 : f32
    %581 = vector.broadcast %cst_42 : f32 to vector<1x128xf32>
    %582 = arith.addf %581, %580 : vector<1x128xf32>
    %583 = arith.divf %581, %582 : vector<1x128xf32>
    %c0_43 = arith.constant 0 : index
    %c0_44 = arith.constant 0 : index
    %c0_45 = arith.constant 0 : index
    %584 = vector.load %arg3[%c0_43, %c0_44, %c0_45] : memref<2x1x128xf32, #tpu.memory_space<vmem>>, vector<1x1x128xf32>
    %585 = vector.shape_cast %584 : vector<1x1x128xf32> to vector<1x128xf32>
    %586 = vector.shape_cast %568 : vector<1x128xf32> to vector<1x1x128xf32>
    tpu.vector_store %arg3[%c0_43, %c0_44, %c0_45], %586 {strides = array<i32>} : memref<2x1x128xf32, #tpu.memory_space<vmem>>, vector<1x1x128xf32>,
    %c1_46 = arith.constant 1 : index
    %c0_47 = arith.constant 0 : index
    %c0_48 = arith.constant 0 : index
    %587 = vector.load %arg3[%c1_46, %c0_47, %c0_48] : memref<2x1x128xf32, #tpu.memory_space<vmem>>, vector<1x1x128xf32>
    %588 = vector.shape_cast %587 : vector<1x1x128xf32> to vector<1x128xf32>
    %589 = vector.shape_cast %583 : vector<1x128xf32> to vector<1x1x128xf32>
    tpu.vector_store %arg3[%c1_46, %c0_47, %c0_48], %589 {strides = array<i32>} : memref<2x1x128xf32, #tpu.memory_space<vmem>>, vector<1x1x128xf32>,
    return
  }
  func.func @transform_0(%arg0: i32, %arg1: memref<136xf32, #tpu.memory_space<smem>>) -> (i32, i32, i32) {
    %c0_i32 = arith.constant 0 : i32
    %c0_i32_0 = arith.constant 0 : i32
    %c0_i32_1 = arith.constant 0 : i32
    return %c0_i32, %arg0, %c0_i32_0 : i32, i32, i32
  }
  func.func @transform_1(%arg0: i32, %arg1: memref<136xf32, #tpu.memory_space<smem>>) -> (i32, i32, i32) {
    %c0_i32 = arith.constant 0 : i32
    %c0_i32_0 = arith.constant 0 : i32
    %c0_i32_1 = arith.constant 0 : i32
    return %c0_i32, %arg0, %c0_i32_0 : i32, i32, i32
  }
}

</mosaic_0001>

<llo_original>
// kernel: tpu_custom_call.1
$region0: #{tpu_custom_call.1}
  #allocation0 [shape = 'u32[]', space=smem, size = 0x4, offset = 0x4, fixed_abs, tag = 'smem constant byte address 0x4 - core index']
  #allocation1 [shape = 'u32[144,128]{1,0:T(1,128)}', space=vmem, size = 0x12000, scoped, tag = 'internal scratch']
  #allocation2 [shape = 's32[1]{0}', space=sflag, size = 0x4, scoped, tag = 'scoped memory for tpu_custom_call.1']
  #allocation3 [shape = 'u8[1024]{0}', space=smem, size = 0x400, scoped, tag = 'prefetched SMEM operand 0']
  %s0 = inlined_call_operand.hbm [shape: f32[136], index: 0, kind: input, shape index: {}]
  %s1 = inlined_call_operand.hbm [shape: f32[8,1,128], index: 1, kind: input, shape index: {}]
  %s2 = inlined_call_operand.hbm [shape: f32[2,1,128], index: 2, kind: output, shape index: {}]
  %s3 = sld [smem:[#allocation0]]
  $region18: #{tpu_custom_call.1} parent=0
    _
  %s5 = ssub.s32 1, %s3
  %s6 = scalar_select 0, %s5, %s3
  %8 = dma.hbm_to_smem %s0, 32, [#allocation3], [#allocation2]
  %9 = dma.done [#allocation2], 32
  %10 = sfence
  $region1: #{tpu_custom_call.1} parent=0
    #allocation4 [shape = 'u8[4096]{0}', space=vmem, size = 0x1000, scoped, tag = 'input window, operand 1, single buffered']
    #allocation5 [shape = 's32[1]{0}', space=sflag, size = 0x4, scoped, tag = 'scoped memory for tpu_custom_call.1']
    #allocation6 [shape = 's32[1]{0}', space=sflag, size = 0x4, scoped, tag = 'scoped memory for tpu_custom_call.1']
    #allocation7 [shape = 'u8[1024]{0}', space=vmem, size = 0x400, scoped, tag = 'output window, operand 0, single buffered']
    %11 = vsyncpa [#allocation5], 0
    %12 = vsyncpa [#allocation6], 0
    // Predicated region
    $region2: #{tpu_custom_call.1} parent=1 // pred_check
      _
    $region3: #{tpu_custom_call.1} parent=1 // pred_check_branch
      %14 = sbr.rel (0) target = $region5
    $region4: #{tpu_custom_call.1} parent=1 // pred_region
      %s16 = ssub.s32 128, 128
      %17 = vsyncadd [#allocation5], %s16
      %s18 = sshll.u32 [#allocation4], 4
      %s19 = int_to_ptr.vmem [resolvable:$true] %s18
      %24 = dma.hbm_to_vmem [thread:$0]  %s1, 128, %s19, [#allocation5], 16, 16, 1
    $region5: #{tpu_custom_call.1} parent=1 // pred_fallthru
      _
    // Predicated region
    $region6: #{tpu_custom_call.1} parent=1 // pred_check
      _
    $region7: #{tpu_custom_call.1} parent=1 // pred_check_branch
      %26 = sbr.rel (0) target = $region9
    $region8: #{tpu_custom_call.1} parent=1 // pred_region
      %27 = dma.done [#allocation5], 128
    $region9: #{tpu_custom_call.1} parent=1 // pred_fallthru
      _
    %s28 = sld [smem:[#allocation3]]
    %s29 = sld [smem:[#allocation3 + $0x1]]
    %s30 = sld [smem:[#allocation3 + $0x2]]
    %s31 = sld [smem:[#allocation3 + $0x3]]
    %s32 = sld [smem:[#allocation3 + $0x4]]
    %s33 = sld [smem:[#allocation3 + $0x5]]
    %s34 = sld [smem:[#allocation3 + $0x6]]
    %s35 = sld [smem:[#allocation3 + $0x7]]
    %s36 = sld [smem:[#allocation3 + $0x8]]
    %s37 = sld [smem:[#allocation3 + $0x9]]
    %s38 = sld [smem:[#allocation3 + $0xa]]
    %s39 = sld [smem:[#allocation3 + $0xb]]
    %s40 = sld [smem:[#allocation3 + $0xc]]
    %s41 = sld [smem:[#allocation3 + $0xd]]
    %s42 = sld [smem:[#allocation3 + $0xe]]
    %s43 = sld [smem:[#allocation3 + $0xf]]
    %s44 = sld [smem:[#allocation3 + $0x10]]
    %s45 = sld [smem:[#allocation3 + $0x11]]
    %s46 = sld [smem:[#allocation3 + $0x12]]
    %s47 = sld [smem:[#allocation3 + $0x13]]
    %s48 = sld [smem:[#allocation3 + $0x14]]
    %s49 = sld [smem:[#allocation3 + $0x15]]
    %s50 = sld [smem:[#allocation3 + $0x16]]
    %s51 = sld [smem:[#allocation3 + $0x17]]
    %s52 = sld [smem:[#allocation3 + $0x18]]
    %s53 = sld [smem:[#allocation3 + $0x19]]
    %s54 = sld [smem:[#allocation3 + $0x1a]]
    %s55 = sld [smem:[#allocation3 + $0x1b]]
    %s56 = sld [smem:[#allocation3 + $0x1c]]
    %s57 = sld [smem:[#allocation3 + $0x1d]]
    %s58 = sld [smem:[#allocation3 + $0x1e]]
    %s59 = sld [smem:[#allocation3 + $0x1f]]
    %s60 = sld [smem:[#allocation3 + $0x20]]
    %s61 = sld [smem:[#allocation3 + $0x21]]
    %s62 = sld [smem:[#allocation3 + $0x22]]
    %s63 = sld [smem:[#allocation3 + $0x23]]
    %s64 = sld [smem:[#allocation3 + $0x24]]
    %s65 = sld [smem:[#allocation3 + $0x25]]
    %s66 = sld [smem:[#allocation3 + $0x26]]
    %s67 = sld [smem:[#allocation3 + $0x27]]
    %s68 = sld [smem:[#allocation3 + $0x28]]
    %s69 = sld [smem:[#allocation3 + $0x29]]
    %s70 = sld [smem:[#allocation3 + $0x2a]]
    %s71 = sld [smem:[#allocation3 + $0x2b]]
    %s72 = sld [smem:[#allocation3 + $0x2c]]
    %s73 = sld [smem:[#allocation3 + $0x2d]]
    %s74 = sld [smem:[#allocation3 + $0x2e]]
    %s75 = sld [smem:[#allocation3 + $0x2f]]
    %s76 = sld [smem:[#allocation3 + $0x30]]
    %s77 = sld [smem:[#allocation3 + $0x31]]
    %s78 = sld [smem:[#allocation3 + $0x32]]
    %s79 = sld [smem:[#allocation3 + $0x33]]
    %s80 = sld [smem:[#allocation3 + $0x34]]
    %s81 = sld [smem:[#allocation3 + $0x35]]
    %s82 = sld [smem:[#allocation3 + $0x36]]
    %s83 = sld [smem:[#allocation3 + $0x37]]
    %s84 = sld [smem:[#allocation3 + $0x38]]
    %s85 = sld [smem:[#allocation3 + $0x39]]
    %s86 = sld [smem:[#allocation3 + $0x3a]]
    %s87 = sld [smem:[#allocation3 + $0x3b]]
    %s88 = sld [smem:[#allocation3 + $0x3c]]
    %s89 = sld [smem:[#allocation3 + $0x3d]]
    %s90 = sld [smem:[#allocation3 + $0x3e]]
    %s91 = sld [smem:[#allocation3 + $0x3f]]
    %s92 = sld [smem:[#allocation3 + $0x40]]
    %s93 = sld [smem:[#allocation3 + $0x41]]
    %s94 = sld [smem:[#allocation3 + $0x42]]
    %s95 = sld [smem:[#allocation3 + $0x43]]
    %s96 = sld [smem:[#allocation3 + $0x44]]
    %s97 = sld [smem:[#allocation3 + $0x45]]
    %s98 = sld [smem:[#allocation3 + $0x46]]
    %s99 = sld [smem:[#allocation3 + $0x47]]
    %s100 = sld [smem:[#allocation3 + $0x48]]
    %s101 = sld [smem:[#allocation3 + $0x49]]
    %s102 = sld [smem:[#allocation3 + $0x4a]]
    %s103 = sld [smem:[#allocation3 + $0x4b]]
    %s104 = sld [smem:[#allocation3 + $0x4c]]
    %s105 = sld [smem:[#allocation3 + $0x4d]]
    %s106 = sld [smem:[#allocation3 + $0x4e]]
    %s107 = sld [smem:[#allocation3 + $0x4f]]
    %s108 = sld [smem:[#allocation3 + $0x50]]
    %s109 = sld [smem:[#allocation3 + $0x51]]
    %s110 = sld [smem:[#allocation3 + $0x52]]
    %s111 = sld [smem:[#allocation3 + $0x53]]
    %s112 = sld [smem:[#allocation3 + $0x54]]
    %s113 = sld [smem:[#allocation3 + $0x55]]
    %s114 = sld [smem:[#allocation3 + $0x56]]
    %s115 = sld [smem:[#allocation3 + $0x57]]
    %s116 = sld [smem:[#allocation3 + $0x58]]
    %s117 = sld [smem:[#allocation3 + $0x59]]
    %s118 = sld [smem:[#allocation3 + $0x5a]]
    %s119 = sld [smem:[#allocation3 + $0x5b]]
    %s120 = sld [smem:[#allocation3 + $0x5c]]
    %s121 = sld [smem:[#allocation3 + $0x5d]]
    %s122 = sld [smem:[#allocation3 + $0x5e]]
    %s123 = sld [smem:[#allocation3 + $0x5f]]
    %s124 = sld [smem:[#allocation3 + $0x60]]
    %s125 = sld [smem:[#allocation3 + $0x61]]
    %s126 = sld [smem:[#allocation3 + $0x62]]
    %s127 = sld [smem:[#allocation3 + $0x63]]
    %s128 = sld [smem:[#allocation3 + $0x64]]
    %s129 = sld [smem:[#allocation3 + $0x65]]
    %s130 = sld [smem:[#allocation3 + $0x66]]
    %s131 = sld [smem:[#allocation3 + $0x67]]
    %s132 = sld [smem:[#allocation3 + $0x68]]
    %s133 = sld [smem:[#allocation3 + $0x69]]
    %s134 = sld [smem:[#allocation3 + $0x6a]]
    %s135 = sld [smem:[#allocation3 + $0x6b]]
    %s136 = sld [smem:[#allocation3 + $0x6c]]
    %s137 = sld [smem:[#allocation3 + $0x6d]]
    %s138 = sld [smem:[#allocation3 + $0x6e]]
    %s139 = sld [smem:[#allocation3 + $0x6f]]
    %s140 = sld [smem:[#allocation3 + $0x70]]
    %s141 = sld [smem:[#allocation3 + $0x71]]
    %s142 = sld [smem:[#allocation3 + $0x72]]
    %s143 = sld [smem:[#allocation3 + $0x73]]
    %s144 = sld [smem:[#allocation3 + $0x74]]
    %s145 = sld [smem:[#allocation3 + $0x75]]
    %s146 = sld [smem:[#allocation3 + $0x76]]
    %s147 = sld [smem:[#allocation3 + $0x77]]
    %s148 = sld [smem:[#allocation3 + $0x78]]
    %s149 = sld [smem:[#allocation3 + $0x79]]
    %s150 = sld [smem:[#allocation3 + $0x7a]]
    %s151 = sld [smem:[#allocation3 + $0x7b]]
    %s152 = sld [smem:[#allocation3 + $0x7c]]
    %s153 = sld [smem:[#allocation3 + $0x7d]]
    %s154 = sld [smem:[#allocation3 + $0x7e]]
    %s155 = sld [smem:[#allocation3 + $0x7f]]
    %s156 = sld [smem:[#allocation3 + $0x80]]
    %s157 = sld [smem:[#allocation3 + $0x81]]
    %s158 = sld [smem:[#allocation3 + $0x82]]
    %s159 = sld [smem:[#allocation3 + $0x83]]
    %s160 = sld [smem:[#allocation3 + $0x84]]
    %s161 = sld [smem:[#allocation3 + $0x85]]
    %s162 = sld [smem:[#allocation3 + $0x86]]
    %s163 = sld [smem:[#allocation3 + $0x87]]
    %v164 = vld [vmem:[#allocation4] sm:$0x1]
    %s165 = scalar_lea.vmem [#allocation4], 1
    %v166 = vld [vmem:[%s165] sm:$0x1]
    %s167 = scalar_lea.vmem [#allocation4], 2
    %v168 = vld [vmem:[%s167] sm:$0x1]
    %s169 = scalar_lea.vmem [#allocation4], 3
    %v170 = vld [vmem:[%s169] sm:$0x1]
    %s171 = scalar_lea.vmem [#allocation4], 4
    %v172 = vld [vmem:[%s171] sm:$0x1]
    %s173 = scalar_lea.vmem [#allocation4], 5
    %v174 = vld [vmem:[%s173] sm:$0x1]
    %s175 = scalar_lea.vmem [#allocation4], 6
    %v176 = vld [vmem:[%s175] sm:$0x1]
    %s177 = scalar_lea.vmem [#allocation4], 7
    %v178 = vld [vmem:[%s177] sm:$0x1]
    %v179 = vstv %s28
    %v180 = vmul.f32 %v164, %v179
    %v181 = vstv %s34
    %v182 = vmul.f32 %v166, %v181
    %v183 = vadd.f32 %v180, %v182
    %v184 = vstv %s40
    %v185 = vmul.f32 %v168, %v184
    %v186 = vadd.f32 %v183, %v185
    %v187 = vstv %s46
    %v188 = vmul.f32 %v170, %v187
    %v189 = vadd.f32 %v186, %v188
    %v190 = vstv %s52
    %v191 = vmul.f32 %v172, %v190
    %v192 = vadd.f32 %v189, %v191
    %v193 = vstv %s58
    %v194 = vmul.f32 %v174, %v193
    %v195 = vadd.f32 %v192, %v194
    %v196 = vstv %s64
    %v197 = vmul.f32 %v176, %v196
    %v198 = vadd.f32 %v195, %v197
    %v199 = vstv %s70
    %v200 = vmul.f32 %v178, %v199
    %v201 = vadd.f32 %v198, %v200
    %v202 = vstv %s76
    %v203 = vadd.f32 %v201, %v202
    %v204 = vmul.f32 %v203, 0.01
    %v205 = vmax.f32 %v203, %v204
    %v206 = vstv %s29
    %v207 = vmul.f32 %v164, %v206
    %v208 = vstv %s35
    %v209 = vmul.f32 %v166, %v208
    %v210 = vadd.f32 %v207, %v209
    %v211 = vstv %s41
    %v212 = vmul.f32 %v168, %v211
    %v213 = vadd.f32 %v210, %v212
    %v214 = vstv %s47
    %v215 = vmul.f32 %v170, %v214
    %v216 = vadd.f32 %v213, %v215
    %v217 = vstv %s53
    %v218 = vmul.f32 %v172, %v217
    %v219 = vadd.f32 %v216, %v218
    %v220 = vstv %s59
    %v221 = vmul.f32 %v174, %v220
    %v222 = vadd.f32 %v219, %v221
    %v223 = vstv %s65
    %v224 = vmul.f32 %v176, %v223
    %v225 = vadd.f32 %v222, %v224
    %v226 = vstv %s71
    %v227 = vmul.f32 %v178, %v226
    %v228 = vadd.f32 %v225, %v227
    %v229 = vstv %s77
    %v230 = vadd.f32 %v228, %v229
    %v231 = vmul.f32 %v230, 0.01
    %v232 = vmax.f32 %v230, %v231
    %v233 = vstv %s30
    %v234 = vmul.f32 %v164, %v233
    %v235 = vstv %s36
    %v236 = vmul.f32 %v166, %v235
    %v237 = vadd.f32 %v234, %v236
    %v238 = vstv %s42
    %v239 = vmul.f32 %v168, %v238
    %v240 = vadd.f32 %v237, %v239
    %v241 = vstv %s48
    %v242 = vmul.f32 %v170, %v241
    %v243 = vadd.f32 %v240, %v242
    %v244 = vstv %s54
    %v245 = vmul.f32 %v172, %v244
    %v246 = vadd.f32 %v243, %v245
    %v247 = vstv %s60
    %v248 = vmul.f32 %v174, %v247
    %v249 = vadd.f32 %v246, %v248
    %v250 = vstv %s66
    %v251 = vmul.f32 %v176, %v250
    %v252 = vadd.f32 %v249, %v251
    %v253 = vstv %s72
    %v254 = vmul.f32 %v178, %v253
    %v255 = vadd.f32 %v252, %v254
    %v256 = vstv %s78
    %v257 = vadd.f32 %v255, %v256
    %v258 = vmul.f32 %v257, 0.01
    %v259 = vmax.f32 %v257, %v258
    %v260 = vstv %s31
    %v261 = vmul.f32 %v164, %v260
    %v262 = vstv %s37
    %v263 = vmul.f32 %v166, %v262
    %v264 = vadd.f32 %v261, %v263
    %v265 = vstv %s43
    %v266 = vmul.f32 %v168, %v265
    %v267 = vadd.f32 %v264, %v266
    %v268 = vstv %s49
    %v269 = vmul.f32 %v170, %v268
    %v270 = vadd.f32 %v267, %v269
    %v271 = vstv %s55
    %v272 = vmul.f32 %v172, %v271
    %v273 = vadd.f32 %v270, %v272
    %v274 = vstv %s61
    %v275 = vmul.f32 %v174, %v274
    %v276 = vadd.f32 %v273, %v275
    %v277 = vstv %s67
    %v278 = vmul.f32 %v176, %v277
    %v279 = vadd.f32 %v276, %v278
    %v280 = vstv %s73
    %v281 = vmul.f32 %v178, %v280
    %v282 = vadd.f32 %v279, %v281
    %v283 = vstv %s79
    %v284 = vadd.f32 %v282, %v283
    %v285 = vmul.f32 %v284, 0.01
    %v286 = vmax.f32 %v284, %v285
    %v287 = vstv %s32
    %v288 = vmul.f32 %v164, %v287
    %v289 = vstv %s38
    %v290 = vmul.f32 %v166, %v289
    %v291 = vadd.f32 %v288, %v290
    %v292 = vstv %s44
    %v293 = vmul.f32 %v168, %v292
    %v294 = vadd.f32 %v291, %v293
    %v295 = vstv %s50
    %v296 = vmul.f32 %v170, %v295
    %v297 = vadd.f32 %v294, %v296
    %v298 = vstv %s56
    %v299 = vmul.f32 %v172, %v298
    %v300 = vadd.f32 %v297, %v299
    %v301 = vstv %s62
    %v302 = vmul.f32 %v174, %v301
    %v303 = vadd.f32 %v300, %v302
    %v304 = vstv %s68
    %v305 = vmul.f32 %v176, %v304
    %v306 = vadd.f32 %v303, %v305
    %v307 = vstv %s74
    %v308 = vmul.f32 %v178, %v307
    %v309 = vadd.f32 %v306, %v308
    %v310 = vstv %s80
    %v311 = vadd.f32 %v309, %v310
    %v312 = vmul.f32 %v311, 0.01
    %v313 = vmax.f32 %v311, %v312
    %v314 = vstv %s33
    %v315 = vmul.f32 %v164, %v314
    %v316 = vstv %s39
    %v317 = vmul.f32 %v166, %v316
    %v318 = vadd.f32 %v315, %v317
    %v319 = vstv %s45
    %v320 = vmul.f32 %v168, %v319
    %v321 = vadd.f32 %v318, %v320
    %v322 = vstv %s51
    %v323 = vmul.f32 %v170, %v322
    %v324 = vadd.f32 %v321, %v323
    %v325 = vstv %s57
    %v326 = vmul.f32 %v172, %v325
    %v327 = vadd.f32 %v324, %v326
    %v328 = vstv %s63
    %v329 = vmul.f32 %v174, %v328
    %v330 = vadd.f32 %v327, %v329
    %v331 = vstv %s69
    %v332 = vmul.f32 %v176, %v331
    %v333 = vadd.f32 %v330, %v332
    %v334 = vstv %s75
    %v335 = vmul.f32 %v178, %v334
    %v336 = vadd.f32 %v333, %v335
    %v337 = vstv %s81
    %v338 = vadd.f32 %v336, %v337
    %v339 = vmul.f32 %v338, 0.01
    %v340 = vmax.f32 %v338, %v339
    %v341 = vstv %s82
    %v342 = vmul.f32 %v205, %v341
    %v343 = vstv %s87
    %v344 = vmul.f32 %v232, %v343
    %v345 = vadd.f32 %v342, %v344
    %v346 = vstv %s92
    %v347 = vmul.f32 %v259, %v346
    %v348 = vadd.f32 %v345, %v347
    %v349 = vstv %s97
    %v350 = vmul.f32 %v286, %v349
    %v351 = vadd.f32 %v348, %v350
    %v352 = vstv %s102
    %v353 = vmul.f32 %v313, %v352
    %v354 = vadd.f32 %v351, %v353
    %v355 = vstv %s107
    %v356 = vmul.f32 %v340, %v355
    %v357 = vadd.f32 %v354, %v356
    %v358 = vstv %s112
    %v359 = vadd.f32 %v357, %v358
    %v360 = vmul.f32 %v359, 0.01
    %v361 = vmax.f32 %v359, %v360
    %v362 = vstv %s83
    %v363 = vmul.f32 %v205, %v362
    %v364 = vstv %s88
    %v365 = vmul.f32 %v232, %v364
    %v366 = vadd.f32 %v363, %v365
    %v367 = vstv %s93
    %v368 = vmul.f32 %v259, %v367
    %v369 = vadd.f32 %v366, %v368
    %v370 = vstv %s98
    %v371 = vmul.f32 %v286, %v370
    %v372 = vadd.f32 %v369, %v371
    %v373 = vstv %s103
    %v374 = vmul.f32 %v313, %v373
    %v375 = vadd.f32 %v372, %v374
    %v376 = vstv %s108
    %v377 = vmul.f32 %v340, %v376
    %v378 = vadd.f32 %v375, %v377
    %v379 = vstv %s113
    %v380 = vadd.f32 %v378, %v379
    %v381 = vmul.f32 %v380, 0.01
    %v382 = vmax.f32 %v380, %v381
    %v383 = vstv %s84
    %v384 = vmul.f32 %v205, %v383
    %v385 = vstv %s89
    %v386 = vmul.f32 %v232, %v385
    %v387 = vadd.f32 %v384, %v386
    %v388 = vstv %s94
    %v389 = vmul.f32 %v259, %v388
    %v390 = vadd.f32 %v387, %v389
    %v391 = vstv %s99
    %v392 = vmul.f32 %v286, %v391
    %v393 = vadd.f32 %v390, %v392
    %v394 = vstv %s104
    %v395 = vmul.f32 %v313, %v394
    %v396 = vadd.f32 %v393, %v395
    %v397 = vstv %s109
    %v398 = vmul.f32 %v340, %v397
    %v399 = vadd.f32 %v396, %v398
    %v400 = vstv %s114
    %v401 = vadd.f32 %v399, %v400
    %v402 = vmul.f32 %v401, 0.01
    %v403 = vmax.f32 %v401, %v402
    %v404 = vstv %s85
    %v405 = vmul.f32 %v205, %v404
    %v406 = vstv %s90
    %v407 = vmul.f32 %v232, %v406
    %v408 = vadd.f32 %v405, %v407
    %v409 = vstv %s95
    %v410 = vmul.f32 %v259, %v409
    %v411 = vadd.f32 %v408, %v410
    %v412 = vstv %s100
    %v413 = vmul.f32 %v286, %v412
    %v414 = vadd.f32 %v411, %v413
    %v415 = vstv %s105
    %v416 = vmul.f32 %v313, %v415
    %v417 = vadd.f32 %v414, %v416
    %v418 = vstv %s110
    %v419 = vmul.f32 %v340, %v418
    %v420 = vadd.f32 %v417, %v419
    %v421 = vstv %s115
    %v422 = vadd.f32 %v420, %v421
    %v423 = vmul.f32 %v422, 0.01
    %v424 = vmax.f32 %v422, %v423
    %v425 = vstv %s86
    %v426 = vmul.f32 %v205, %v425
    %v427 = vstv %s91
    %v428 = vmul.f32 %v232, %v427
    %v429 = vadd.f32 %v426, %v428
    %v430 = vstv %s96
    %v431 = vmul.f32 %v259, %v430
    %v432 = vadd.f32 %v429, %v431
    %v433 = vstv %s101
    %v434 = vmul.f32 %v286, %v433
    %v435 = vadd.f32 %v432, %v434
    %v436 = vstv %s106
    %v437 = vmul.f32 %v313, %v436
    %v438 = vadd.f32 %v435, %v437
    %v439 = vstv %s111
    %v440 = vmul.f32 %v340, %v439
    %v441 = vadd.f32 %v438, %v440
    %v442 = vstv %s116
    %v443 = vadd.f32 %v441, %v442
    %v444 = vmul.f32 %v443, 0.01
    %v445 = vmax.f32 %v443, %v444
    %v446 = vstv %s117
    %v447 = vmul.f32 %v361, %v446
    %v448 = vstv %s121
    %v449 = vmul.f32 %v382, %v448
    %v450 = vadd.f32 %v447, %v449
    %v451 = vstv %s125
    %v452 = vmul.f32 %v403, %v451
    %v453 = vadd.f32 %v450, %v452
    %v454 = vstv %s129
    %v455 = vmul.f32 %v424, %v454
    %v456 = vadd.f32 %v453, %v455
    %v457 = vstv %s133
    %v458 = vmul.f32 %v445, %v457
    %v459 = vadd.f32 %v456, %v458
    %v460 = vstv %s137
    %v461 = vadd.f32 %v459, %v460
    %v462 = vmul.f32 %v461, 0.01
    %v463 = vmax.f32 %v461, %v462
    %v464 = vstv %s118
    %v465 = vmul.f32 %v361, %v464
    %v466 = vstv %s122
    %v467 = vmul.f32 %v382, %v466
    %v468 = vadd.f32 %v465, %v467
    %v469 = vstv %s126
    %v470 = vmul.f32 %v403, %v469
    %v471 = vadd.f32 %v468, %v470
    %v472 = vstv %s130
    %v473 = vmul.f32 %v424, %v472
    %v474 = vadd.f32 %v471, %v473
    %v475 = vstv %s134
    %v476 = vmul.f32 %v445, %v475
    %v477 = vadd.f32 %v474, %v476
    %v478 = vstv %s138
    %v479 = vadd.f32 %v477, %v478
    %v480 = vmul.f32 %v479, 0.01
    %v481 = vmax.f32 %v479, %v480
    %v482 = vstv %s119
    %v483 = vmul.f32 %v361, %v482
    %v484 = vstv %s123
    %v485 = vmul.f32 %v382, %v484
    %v486 = vadd.f32 %v483, %v485
    %v487 = vstv %s127
    %v488 = vmul.f32 %v403, %v487
    %v489 = vadd.f32 %v486, %v488
    %v490 = vstv %s131
    %v491 = vmul.f32 %v424, %v490
    %v492 = vadd.f32 %v489, %v491
    %v493 = vstv %s135
    %v494 = vmul.f32 %v445, %v493
    %v495 = vadd.f32 %v492, %v494
    %v496 = vstv %s139
    %v497 = vadd.f32 %v495, %v496
    %v498 = vmul.f32 %v497, 0.01
    %v499 = vmax.f32 %v497, %v498
    %v500 = vstv %s120
    %v501 = vmul.f32 %v361, %v500
    %v502 = vstv %s124
    %v503 = vmul.f32 %v382, %v502
    %v504 = vadd.f32 %v501, %v503
    %v505 = vstv %s128
    %v506 = vmul.f32 %v403, %v505
    %v507 = vadd.f32 %v504, %v506
    %v508 = vstv %s132
    %v509 = vmul.f32 %v424, %v508
    %v510 = vadd.f32 %v507, %v509
    %v511 = vstv %s136
    %v512 = vmul.f32 %v445, %v511
    %v513 = vadd.f32 %v510, %v512
    %v514 = vstv %s140
    %v515 = vadd.f32 %v513, %v514
    %v516 = vmul.f32 %v515, 0.01
    %v517 = vmax.f32 %v515, %v516
    %v518 = vstv %s141
    %v519 = vmul.f32 %v463, %v518
    %v520 = vstv %s144
    %v521 = vmul.f32 %v481, %v520
    %v522 = vadd.f32 %v519, %v521
    %v523 = vstv %s147
    %v524 = vmul.f32 %v499, %v523
    %v525 = vadd.f32 %v522, %v524
    %v526 = vstv %s150
    %v527 = vmul.f32 %v517, %v526
    %v528 = vadd.f32 %v525, %v527
    %v529 = vstv %s153
    %v530 = vadd.f32 %v528, %v529
    %v531 = vmul.f32 %v530, 0.01
    %v532 = vmax.f32 %v530, %v531
    %v533 = vstv %s142
    %v534 = vmul.f32 %v463, %v533
    %v535 = vstv %s145
    %v536 = vmul.f32 %v481, %v535
    %v537 = vadd.f32 %v534, %v536
    %v538 = vstv %s148
    %v539 = vmul.f32 %v499, %v538
    %v540 = vadd.f32 %v537, %v539
    %v541 = vstv %s151
    %v542 = vmul.f32 %v517, %v541
    %v543 = vadd.f32 %v540, %v542
    %v544 = vstv %s154
    %v545 = vadd.f32 %v543, %v544
    %v546 = vmul.f32 %v545, 0.01
    %v547 = vmax.f32 %v545, %v546
    %v548 = vstv %s143
    %v549 = vmul.f32 %v463, %v548
    %v550 = vstv %s146
    %v551 = vmul.f32 %v481, %v550
    %v552 = vadd.f32 %v549, %v551
    %v553 = vstv %s149
    %v554 = vmul.f32 %v499, %v553
    %v555 = vadd.f32 %v552, %v554
    %v556 = vstv %s152
    %v557 = vmul.f32 %v517, %v556
    %v558 = vadd.f32 %v555, %v557
    %v559 = vstv %s155
    %v560 = vadd.f32 %v558, %v559
    %v561 = vmul.f32 %v560, 0.01
    %v562 = vmax.f32 %v560, %v561
    %v563 = vstv %s156
    %v564 = vmul.f32 %v532, %v563
    %v565 = vstv %s158
    %v566 = vmul.f32 %v547, %v565
    %v567 = vadd.f32 %v564, %v566
    %v568 = vstv %s160
    %v569 = vmul.f32 %v562, %v568
    %v570 = vadd.f32 %v567, %v569
    %v571 = vstv %s162
    %v572 = vadd.f32 %v570, %v571
    %v573 = vxor.u32 %v572, 2147483648
    %v574 = vmul.f32 %v573, 1.442695
    %v575 = vpow.pop %v574
    %v576 = vadd.f32 %v575, 1.0
    %v577 = vrcp.pop %v576
    %v578 = vmul.f32 1.0, %v577
    %v579 = vstv %s157
    %v580 = vmul.f32 %v532, %v579
    %v581 = vstv %s159
    %v582 = vmul.f32 %v547, %v581
    %v583 = vadd.f32 %v580, %v582
    %v584 = vstv %s161
    %v585 = vmul.f32 %v562, %v584
    %v586 = vadd.f32 %v583, %v585
    %v587 = vstv %s163
    %v588 = vadd.f32 %v586, %v587
    %v589 = vxor.u32 %v588, 2147483648
    %v590 = vmul.f32 %v589, 1.442695
    %v591 = vpow.pop %v590
    %v592 = vadd.f32 %v591, 1.0
    %v593 = vrcp.pop %v592
    %v594 = vmul.f32 1.0, %v593
    %595 = vst [vmem:[#allocation7] sm:$0x1] %v578
    %s596 = scalar_lea.vmem [#allocation7], 1
    %597 = vst [vmem:[%s596] sm:$0x1] %v594
    // Predicated region
    $region10: #{tpu_custom_call.1} parent=1 // pred_check
      _
    $region11: #{tpu_custom_call.1} parent=1 // pred_check_branch
      %599 = sbr.rel (0) target = $region13
    $region12: #{tpu_custom_call.1} parent=1 // pred_region
      %s601 = ssub.s32 32, 32
      %602 = vsyncadd [#allocation6], %s601
      %s603 = sshll.u32 [#allocation7], 4
      %s604 = int_to_ptr.vmem [resolvable:$true] %s603
      %609 = dma.vmem_to_hbm [thread:$0]  %s604, 32, %s2, [#allocation6], 16, 16, 1
    $region13: #{tpu_custom_call.1} parent=1 // pred_fallthru
      _
    // Predicated region
    $region14: #{tpu_custom_call.1} parent=1 // pred_check
      _
    $region15: #{tpu_custom_call.1} parent=1 // pred_check_branch
      %611 = sbr.rel (0) target = $region17
    $region16: #{tpu_custom_call.1} parent=1 // pred_region
      %612 = dma.done [#allocation6], 32
    $region17: #{tpu_custom_call.1} parent=1 // pred_fallthru
      _
    %613 = vsyncpa [#allocation5], 1
    %614 = vsyncpa [#allocation6], 1

</llo_original>
